<compile_context>
chip_gen: v7x
topology: tpu7x:2x2x1
jax: 0.10.0
libtpu: 0.0.40
codegen_flags: <defaults>
</compile_context>

<pallas_src>
import functools

import jax
import jax.numpy as jnp
from jax.experimental import pallas as pl
from jax.experimental.pallas import tpu as pltpu


_LANE = 128


def _round_up(x, m):
    return ((x + m - 1) // m) * m


def _vmem_spec():
    return pl.BlockSpec(memory_space=pltpu.MemorySpace.VMEM)


# ----------------------------- Pallas kernel -----------------------------

def _scconv_fused_kernel(x0_ref, x1_ref, x2_ref,
                         w0_ref, b0_ref, w1_ref, b1_ref, w2_ref, b2_ref,
                         l0_ref, l1_ref, l2_ref,
                         b2d3_ref, d2b1td1inv_ref, d1invb1_ref, b2td2inv_ref,
                         o0_ref, o1_ref, o2_ref, *, d_pad):
    D = d_pad

    # ---- Linear stage: one MXU push per feature type (weights are
    #      lane-concatenated, post-relu scale already folded in). ----
    H0 = jnp.dot(x0_ref[...], w0_ref[...],
                 preferred_element_type=jnp.float32) + b0_ref[...]   # [n0, 2D]
    H1 = jnp.dot(x1_ref[...], w1_ref[...],
                 preferred_element_type=jnp.float32) + b1_ref[...]   # [n1, 3D]
    H2 = jnp.dot(x2_ref[...], w2_ref[...],
                 preferred_element_type=jnp.float32) + b2_ref[...]   # [n2, 2D]

    # 128-aligned static lane slices -> free.
    h_n2n = H0[:, 0:D]
    h_n2e = H0[:, D:2 * D]
    h_e2e = H1[:, 0:D]
    h_e2n = H1[:, D:2 * D]
    h_e2t = H1[:, 2 * D:3 * D]
    h_t2t = H2[:, 0:D]
    h_t2e = H2[:, D:2 * D]

    # ---- Propagation + sum + relu (scale pre-folded). Sequential
    #      accumulation keeps live ranges short. ----
    y0 = jnp.dot(l0_ref[...], h_n2n, preferred_element_type=jnp.float32)
    y0 = y0 + jnp.dot(d1invb1_ref[...], h_e2n,
                      preferred_element_type=jnp.float32)
    o0_ref[...] = jnp.maximum(y0, 0.0)

    y1 = jnp.dot(l1_ref[...], h_e2e, preferred_element_type=jnp.float32)
    y1 = y1 + jnp.dot(d2b1td1inv_ref[...], h_n2e,
                      preferred_element_type=jnp.float32)
    y1 = y1 + jnp.dot(b2d3_ref[...], h_t2e,
                      preferred_element_type=jnp.float32)
    o1_ref[...] = jnp.maximum(y1, 0.0)

    y2 = jnp.dot(l2_ref[...], h_t2t, preferred_element_type=jnp.float32)
    y2 = y2 + jnp.dot(b2td2inv_ref[...], h_e2t,
                      preferred_element_type=jnp.float32)
    o2_ref[...] = jnp.maximum(y2, 0.0)


# ----------------------------- parameters -----------------------------

def init_scconv_params(key, num_node_feats, num_edge_feats,
                       num_triangle_feats, output_size):
    """Canonical nn.Linear-style params. Weights stored as [in, out]."""
    names_dims = [
        ("n2n", num_node_feats),
        ("n2e", num_node_feats),
        ("e2e", num_edge_feats),
        ("e2n", num_edge_feats),
        ("e2t", num_edge_feats),
        ("t2e", num_triangle_feats),
        ("t2t", num_triangle_feats),
    ]
    params = {}
    keys = jax.random.split(key, 2 * len(names_dims))
    for i, (name, in_dim) in enumerate(names_dims):
        bound = 1.0 / jnp.sqrt(jnp.float32(in_dim))
        w = jax.random.uniform(keys[2 * i], (in_dim, output_size),
                               jnp.float32, -bound, bound)
        b = jax.random.uniform(keys[2 * i + 1], (1, output_size),
                               jnp.float32, -bound, bound)
        params[name] = (w, b)
    return params


def prepare_scconv_kernel_params(params, output_size):
    """One-time transform: fold post-relu scales, pad to 128 lanes, and
    lane-concatenate weights that share the same input feature matrix."""
    d_pad = _round_up(max(output_size, _LANE), _LANE)
    pad = d_pad - output_size

    def scaled_padded(name, scale):
        w, b = params[name]
        w = jnp.pad(scale * w, ((0, 0), (0, pad)))
        b = jnp.pad(scale * b, ((0, 0), (0, pad)))
        return w, b

    wn2n, bn2n = scaled_padded("n2n", 0.5)
    wn2e, bn2e = scaled_padded("n2e", 1.0 / 3.0)
    we2e, be2e = scaled_padded("e2e", 1.0 / 3.0)
    we2n, be2n = scaled_padded("e2n", 0.5)
    we2t, be2t = scaled_padded("e2t", 0.5)
    wt2e, bt2e = scaled_padded("t2e", 1.0 / 3.0)
    wt2t, bt2t = scaled_padded("t2t", 0.5)

    return {
        # applied to X0 -> [h_n2n | h_n2e]
        "W0": jnp.concatenate([wn2n, wn2e], axis=1),
        "b0": jnp.concatenate([bn2n, bn2e], axis=1),
        # applied to X1 -> [h_e2e | h_e2n | h_e2t]
        "W1": jnp.concatenate([we2e, we2n, we2t], axis=1),
        "b1": jnp.concatenate([be2e, be2n, be2t], axis=1),
        # applied to X2 -> [h_t2t | h_t2e]
        "W2": jnp.concatenate([wt2t, wt2e], axis=1),
        "b2": jnp.concatenate([bt2t, bt2e], axis=1),
    }


# ----------------------------- forward -----------------------------

@functools.partial(jax.jit, static_argnames=("output_size",))
def scconv_layer_forward(kparams, X0, X1, X2, L0, L1, L2,
                         B2D3, D2B1TD1inv, D1invB1, B2TD2inv, *, output_size):
    W0, b0 = kparams["W0"], kparams["b0"]
    W1, b1 = kparams["W1"], kparams["b1"]
    W2, b2 = kparams["W2"], kparams["b2"]
    d_pad = W0.shape[1] // 2
    n0, n1, n2 = X0.shape[0], X1.shape[0], X2.shape[0]

    kern = functools.partial(_scconv_fused_kernel, d_pad=d_pad)
    out0, out1, out2 = pl.pallas_call(
        kern,
        out_shape=(jax.ShapeDtypeStruct((n0, d_pad), jnp.float32),
                   jax.ShapeDtypeStruct((n1, d_pad), jnp.float32),
                   jax.ShapeDtypeStruct((n2, d_pad), jnp.float32)),
        in_specs=[_vmem_spec()] * 16,
        out_specs=(_vmem_spec(), _vmem_spec(), _vmem_spec()),
    )(X0, X1, X2, W0, b0, W1, b1, W2, b2,
      L0, L1, L2, B2D3, D2B1TD1inv, D1invB1, B2TD2inv)

    # Strip lane padding back to the module's output_size.
    return (out0[:, :output_size],
            out1[:, :output_size],
            out2[:, :output_size])


def _reference(params, X0, X1, X2, L0, L1, L2,
               B2D3, D2B1TD1inv, D1invB1, B2TD2inv):
    """Pure-jnp reference mirroring the PyTorch forward (unscaled params)."""
    lin = lambda x, wb: x @ wb[0] + wb[1]
    relu = lambda x: jnp.maximum(x, 0.0)
    n2n = L0 @ lin(X0, params["n2n"])
    n2e = D2B1TD1inv @ lin(X0, params["n2e"])
    e2n = D1invB1 @ lin(X1, params["e2n"])
    e2e = L1 @ lin(X1, params["e2e"])
    e2t = B2TD2inv @ lin(X1, params["e2t"])
    t2t = L2 @ lin(X2, params["t2t"])
    t2e = B2D3 @ lin(X2, params["t2e"])
    return (0.5 * relu(n2n + e2n),
            (1.0 / 3.0) * relu(e2e + n2e + t2e),
            0.5 * relu(t2t + e2t))


# ----------------------------- main -----------------------------

if __name__ == "__main__":
    num_node_feats, num_edge_feats, num_triangle_feats = 6, 10, 4
    output_size = 16
    n0, n1, n2 = 8, 12, 5

    key = jax.random.PRNGKey(0)
    k = jax.random.split(key, 12)

    params = init_scconv_params(k[0], num_node_feats, num_edge_feats,
                                num_triangle_feats, output_size)
    kparams = prepare_scconv_kernel_params(params, output_size)

    X0 = jax.random.normal(k[1], (n0, num_node_feats), jnp.float32)
    X1 = jax.random.normal(k[2], (n1, num_edge_feats), jnp.float32)
    X2 = jax.random.normal(k[3], (n2, num_triangle_feats), jnp.float32)

    L0 = jax.random.normal(k[4], (n0, n0), jnp.float32)
    L1 = jax.random.normal(k[5], (n1, n1), jnp.float32)
    L2 = jax.random.normal(k[6], (n2, n2), jnp.float32)
    B2D3 = jax.random.normal(k[7], (n1, n2), jnp.float32)
    D2B1TD1inv = jax.random.normal(k[8], (n1, n0), jnp.float32)
    D1invB1 = jax.random.normal(k[9], (n0, n1), jnp.float32)
    B2TD2inv = jax.random.normal(k[10], (n2, n1), jnp.float32)

    outs = scconv_layer_forward(kparams, X0, X1, X2, L0, L1, L2,
                                B2D3, D2B1TD1inv, D1invB1, B2TD2inv,
                                output_size=output_size)
    outs = jax.block_until_ready(outs)

    refs = _reference(params, X0, X1, X2, L0, L1, L2,
                      B2D3, D2B1TD1inv, D1invB1, B2TD2inv)
    for o, r in zip(outs, refs):
        assert o.shape == r.shape
        assert jnp.allclose(o, r, atol=1e-4, rtol=1e-4)

    print("KERNEL_OK")
</pallas_src>

<mosaic_0001>
module attributes {stable_mosaic.version = 11 : i64} {
  func.func @_scconv_fused_kernel(%arg0: memref<8x6xf32, #tpu.memory_space<vmem>>, %arg1: memref<12x10xf32, #tpu.memory_space<vmem>>, %arg2: memref<5x4xf32, #tpu.memory_space<vmem>>, %arg3: memref<6x256xf32, #tpu.memory_space<vmem>>, %arg4: memref<1x256xf32, #tpu.memory_space<vmem>>, %arg5: memref<10x384xf32, #tpu.memory_space<vmem>>, %arg6: memref<1x384xf32, #tpu.memory_space<vmem>>, %arg7: memref<4x256xf32, #tpu.memory_space<vmem>>, %arg8: memref<1x256xf32, #tpu.memory_space<vmem>>, %arg9: memref<8x8xf32, #tpu.memory_space<vmem>>, %arg10: memref<12x12xf32, #tpu.memory_space<vmem>>, %arg11: memref<5x5xf32, #tpu.memory_space<vmem>>, %arg12: memref<12x5xf32, #tpu.memory_space<vmem>>, %arg13: memref<12x8xf32, #tpu.memory_space<vmem>>, %arg14: memref<8x12xf32, #tpu.memory_space<vmem>>, %arg15: memref<5x12xf32, #tpu.memory_space<vmem>>, %arg16: memref<8x128xf32, #tpu.memory_space<vmem>>, %arg17: memref<12x128xf32, #tpu.memory_space<vmem>>, %arg18: memref<5x128xf32, #tpu.memory_space<vmem>>) attributes {dimension_semantics = [], scalar_prefetch = 0 : i64, scratch_operands = 0 : i64, tpu.core_type = #tpu.core_type<tc>} {
    %c0 = arith.constant 0 : index
    %c0_0 = arith.constant 0 : index
    %0 = vector.load %arg0[%c0, %c0_0] : memref<8x6xf32, #tpu.memory_space<vmem>>, vector<8x6xf32>
    %c0_1 = arith.constant 0 : index
    %c0_2 = arith.constant 0 : index
    %1 = vector.load %arg3[%c0_1, %c0_2] : memref<6x256xf32, #tpu.memory_space<vmem>>, vector<6x256xf32>
    %cst = arith.constant dense<0.000000e+00> : vector<8x256xf32>
    %2 = tpu.matmul %0, %1, %cst {dimension_numbers = #tpu.dot_dimension_numbers<[1], [0], [0], [1], [0, 0, 1, 1], [], []>} : vector<8x6xf32>, vector<6x256xf32>, vector<8x256xf32> -> vector<8x256xf32>
    %c0_3 = arith.constant 0 : index
    %c0_4 = arith.constant 0 : index
    %3 = vector.load %arg4[%c0_3, %c0_4] : memref<1x256xf32, #tpu.memory_space<vmem>>, vector<1x256xf32>
    %4 = vector.broadcast %3 : vector<1x256xf32> to vector<8x256xf32>
    %5 = arith.addf %2, %4 : vector<8x256xf32>
    %c0_5 = arith.constant 0 : index
    %c0_6 = arith.constant 0 : index
    %6 = vector.load %arg1[%c0_5, %c0_6] : memref<12x10xf32, #tpu.memory_space<vmem>>, vector<12x10xf32>
    %c0_7 = arith.constant 0 : index
    %c0_8 = arith.constant 0 : index
    %7 = vector.load %arg5[%c0_7, %c0_8] : memref<10x384xf32, #tpu.memory_space<vmem>>, vector<10x384xf32>
    %cst_9 = arith.constant dense<0.000000e+00> : vector<12x384xf32>
    %8 = tpu.matmul %6, %7, %cst_9 {dimension_numbers = #tpu.dot_dimension_numbers<[1], [0], [0], [1], [0, 0, 1, 1], [], []>} : vector<12x10xf32>, vector<10x384xf32>, vector<12x384xf32> -> vector<12x384xf32>
    %c0_10 = arith.constant 0 : index
    %c0_11 = arith.constant 0 : index
    %9 = vector.load %arg6[%c0_10, %c0_11] : memref<1x384xf32, #tpu.memory_space<vmem>>, vector<1x384xf32>
    %10 = vector.broadcast %9 : vector<1x384xf32> to vector<12x384xf32>
    %11 = arith.addf %8, %10 : vector<12x384xf32>
    %c0_12 = arith.constant 0 : index
    %c0_13 = arith.constant 0 : index
    %12 = vector.load %arg2[%c0_12, %c0_13] : memref<5x4xf32, #tpu.memory_space<vmem>>, vector<5x4xf32>
    %c0_14 = arith.constant 0 : index
    %c0_15 = arith.constant 0 : index
    %13 = vector.load %arg7[%c0_14, %c0_15] : memref<4x256xf32, #tpu.memory_space<vmem>>, vector<4x256xf32>
    %cst_16 = arith.constant dense<0.000000e+00> : vector<5x256xf32>
    %14 = tpu.matmul %12, %13, %cst_16 {dimension_numbers = #tpu.dot_dimension_numbers<[1], [0], [0], [1], [0, 0, 1, 1], [], []>} : vector<5x4xf32>, vector<4x256xf32>, vector<5x256xf32> -> vector<5x256xf32>
    %c0_17 = arith.constant 0 : index
    %c0_18 = arith.constant 0 : index
    %15 = vector.load %arg8[%c0_17, %c0_18] : memref<1x256xf32, #tpu.memory_space<vmem>>, vector<1x256xf32>
    %16 = vector.broadcast %15 : vector<1x256xf32> to vector<5x256xf32>
    %17 = arith.addf %14, %16 : vector<5x256xf32>
    %18 = vector.extract_strided_slice %5 {offsets = [0, 0], sizes = [8, 128], strides = [1, 1]} : vector<8x256xf32> to vector<8x128xf32>
    %19 = vector.extract_strided_slice %5 {offsets = [0, 128], sizes = [8, 128], strides = [1, 1]} : vector<8x256xf32> to vector<8x128xf32>
    %20 = vector.extract_strided_slice %11 {offsets = [0, 0], sizes = [12, 128], strides = [1, 1]} : vector<12x384xf32> to vector<12x128xf32>
    %21 = vector.extract_strided_slice %11 {offsets = [0, 128], sizes = [12, 128], strides = [1, 1]} : vector<12x384xf32> to vector<12x128xf32>
    %22 = vector.extract_strided_slice %11 {offsets = [0, 256], sizes = [12, 128], strides = [1, 1]} : vector<12x384xf32> to vector<12x128xf32>
    %23 = vector.extract_strided_slice %17 {offsets = [0, 0], sizes = [5, 128], strides = [1, 1]} : vector<5x256xf32> to vector<5x128xf32>
    %24 = vector.extract_strided_slice %17 {offsets = [0, 128], sizes = [5, 128], strides = [1, 1]} : vector<5x256xf32> to vector<5x128xf32>
    %c0_19 = arith.constant 0 : index
    %c0_20 = arith.constant 0 : index
    %25 = vector.load %arg9[%c0_19, %c0_20] : memref<8x8xf32, #tpu.memory_space<vmem>>, vector<8x8xf32>
    %cst_21 = arith.constant dense<0.000000e+00> : vector<8x128xf32>
    %26 = tpu.matmul %25, %18, %cst_21 {dimension_numbers = #tpu.dot_dimension_numbers<[1], [0], [0], [1], [0, 0, 1, 1], [], []>} : vector<8x8xf32>, vector<8x128xf32>, vector<8x128xf32> -> vector<8x128xf32>
    %c0_22 = arith.constant 0 : index
    %c0_23 = arith.constant 0 : index
    %27 = vector.load %arg14[%c0_22, %c0_23] : memref<8x12xf32, #tpu.memory_space<vmem>>, vector<8x12xf32>
    %cst_24 = arith.constant dense<0.000000e+00> : vector<8x128xf32>
    %28 = tpu.matmul %27, %21, %cst_24 {dimension_numbers = #tpu.dot_dimension_numbers<[1], [0], [0], [1], [0, 0, 1, 1], [], []>} : vector<8x12xf32>, vector<12x128xf32>, vector<8x128xf32> -> vector<8x128xf32>
    %29 = arith.addf %26, %28 : vector<8x128xf32>
    %cst_25 = arith.constant 0.000000e+00 : f32
    %30 = vector.broadcast %cst_25 : f32 to vector<8x128xf32>
    %31 = arith.maximumf %29, %30 : vector<8x128xf32>
    %c0_26 = arith.constant 0 : index
    %c0_27 = arith.constant 0 : index
    %32 = vector.load %arg16[%c0_26, %c0_27] : memref<8x128xf32, #tpu.memory_space<vmem>>, vector<8x128xf32>
    tpu.vector_store %arg16[%c0_26, %c0_27], %31 {strides = array<i32>} : memref<8x128xf32, #tpu.memory_space<vmem>>, vector<8x128xf32>,
    %c0_28 = arith.constant 0 : index
    %c0_29 = arith.constant 0 : index
    %33 = vector.load %arg10[%c0_28, %c0_29] : memref<12x12xf32, #tpu.memory_space<vmem>>, vector<12x12xf32>
    %cst_30 = arith.constant dense<0.000000e+00> : vector<12x128xf32>
    %34 = tpu.matmul %33, %20, %cst_30 {dimension_numbers = #tpu.dot_dimension_numbers<[1], [0], [0], [1], [0, 0, 1, 1], [], []>} : vector<12x12xf32>, vector<12x128xf32>, vector<12x128xf32> -> vector<12x128xf32>
    %c0_31 = arith.constant 0 : index
    %c0_32 = arith.constant 0 : index
    %35 = vector.load %arg13[%c0_31, %c0_32] : memref<12x8xf32, #tpu.memory_space<vmem>>, vector<12x8xf32>
    %cst_33 = arith.constant dense<0.000000e+00> : vector<12x128xf32>
    %36 = tpu.matmul %35, %19, %cst_33 {dimension_numbers = #tpu.dot_dimension_numbers<[1], [0], [0], [1], [0, 0, 1, 1], [], []>} : vector<12x8xf32>, vector<8x128xf32>, vector<12x128xf32> -> vector<12x128xf32>
    %37 = arith.addf %34, %36 : vector<12x128xf32>
    %c0_34 = arith.constant 0 : index
    %c0_35 = arith.constant 0 : index
    %38 = vector.load %arg12[%c0_34, %c0_35] : memref<12x5xf32, #tpu.memory_space<vmem>>, vector<12x5xf32>
    %cst_36 = arith.constant dense<0.000000e+00> : vector<12x128xf32>
    %39 = tpu.matmul %38, %24, %cst_36 {dimension_numbers = #tpu.dot_dimension_numbers<[1], [0], [0], [1], [0, 0, 1, 1], [], []>} : vector<12x5xf32>, vector<5x128xf32>, vector<12x128xf32> -> vector<12x128xf32>
    %40 = arith.addf %37, %39 : vector<12x128xf32>
    %cst_37 = arith.constant 0.000000e+00 : f32
    %41 = vector.broadcast %cst_37 : f32 to vector<12x128xf32>
    %42 = arith.maximumf %40, %41 : vector<12x128xf32>
    %c0_38 = arith.constant 0 : index
    %c0_39 = arith.constant 0 : index
    %43 = vector.load %arg17[%c0_38, %c0_39] : memref<12x128xf32, #tpu.memory_space<vmem>>, vector<12x128xf32>
    tpu.vector_store %arg17[%c0_38, %c0_39], %42 {strides = array<i32>} : memref<12x128xf32, #tpu.memory_space<vmem>>, vector<12x128xf32>,
    %c0_40 = arith.constant 0 : index
    %c0_41 = arith.constant 0 : index
    %44 = vector.load %arg11[%c0_40, %c0_41] : memref<5x5xf32, #tpu.memory_space<vmem>>, vector<5x5xf32>
    %cst_42 = arith.constant dense<0.000000e+00> : vector<5x128xf32>
    %45 = tpu.matmul %44, %23, %cst_42 {dimension_numbers = #tpu.dot_dimension_numbers<[1], [0], [0], [1], [0, 0, 1, 1], [], []>} : vector<5x5xf32>, vector<5x128xf32>, vector<5x128xf32> -> vector<5x128xf32>
    %c0_43 = arith.constant 0 : index
    %c0_44 = arith.constant 0 : index
    %46 = vector.load %arg15[%c0_43, %c0_44] : memref<5x12xf32, #tpu.memory_space<vmem>>, vector<5x12xf32>
    %cst_45 = arith.constant dense<0.000000e+00> : vector<5x128xf32>
    %47 = tpu.matmul %46, %22, %cst_45 {dimension_numbers = #tpu.dot_dimension_numbers<[1], [0], [0], [1], [0, 0, 1, 1], [], []>} : vector<5x12xf32>, vector<12x128xf32>, vector<5x128xf32> -> vector<5x128xf32>
    %48 = arith.addf %45, %47 : vector<5x128xf32>
    %cst_46 = arith.constant 0.000000e+00 : f32
    %49 = vector.broadcast %cst_46 : f32 to vector<5x128xf32>
    %50 = arith.maximumf %48, %49 : vector<5x128xf32>
    %c0_47 = arith.constant 0 : index
    %c0_48 = arith.constant 0 : index
    %51 = vector.load %arg18[%c0_47, %c0_48] : memref<5x128xf32, #tpu.memory_space<vmem>>, vector<5x128xf32>
    tpu.vector_store %arg18[%c0_47, %c0_48], %50 {strides = array<i32>} : memref<5x128xf32, #tpu.memory_space<vmem>>, vector<5x128xf32>,
    return
  }
}

</mosaic_0001>

<llo_original>
// kernel: scconv_layer_forward.1
$region0: #{scconv_layer_forward.1}
  #allocation0 [shape = 'u32[]', space=smem, size = 0x4, offset = 0x4, fixed_abs, tag = 'smem constant byte address 0x4 - core index']
  #allocation1 [shape = 'u32[144,128]{1,0:T(1,128)}', space=vmem, size = 0x12000, scoped, tag = 'internal scratch']
  %s0 = inlined_call_operand.hbm [shape: f32[8,6], index: 0, kind: input, shape index: {}]
  %s1 = inlined_call_operand.vmem [shape: f32[12,10], index: 1, kind: input, shape index: {}]
  %s2 = inlined_call_operand.vmem [shape: f32[5,4], index: 2, kind: input, shape index: {}]
  %s3 = inlined_call_operand.hbm [shape: f32[6,256], index: 3, kind: input, shape index: {}]
  %s4 = inlined_call_operand.hbm [shape: f32[1,256], index: 4, kind: input, shape index: {}]
  %s5 = inlined_call_operand.vmem [shape: f32[10,384], index: 5, kind: input, shape index: {}]
  %s6 = inlined_call_operand.hbm [shape: f32[1,384], index: 6, kind: input, shape index: {}]
  %s7 = inlined_call_operand.hbm [shape: f32[4,256], index: 7, kind: input, shape index: {}]
  %s8 = inlined_call_operand.hbm [shape: f32[1,256], index: 8, kind: input, shape index: {}]
  %s9 = inlined_call_operand.hbm [shape: f32[8,8], index: 9, kind: input, shape index: {}]
  %s10 = inlined_call_operand.vmem [shape: f32[12,12], index: 10, kind: input, shape index: {}]
  %s11 = inlined_call_operand.hbm [shape: f32[5,5], index: 11, kind: input, shape index: {}]
  %s12 = inlined_call_operand.vmem [shape: f32[12,5], index: 12, kind: input, shape index: {}]
  %s13 = inlined_call_operand.vmem [shape: f32[12,8], index: 13, kind: input, shape index: {}]
  %s14 = inlined_call_operand.vmem [shape: f32[8,12], index: 14, kind: input, shape index: {}]
  %s15 = inlined_call_operand.vmem [shape: f32[5,12], index: 15, kind: input, shape index: {}]
  %s16 = inlined_call_operand.hbm [shape: f32[8,128], index: 16, kind: output, shape index: {0}]
  %s17 = inlined_call_operand.hbm [shape: f32[12,128], index: 17, kind: output, shape index: {1}]
  %s18 = inlined_call_operand.hbm [shape: f32[5,128], index: 18, kind: output, shape index: {2}]
  %19 = xla_tuple %s16, %s17, %s18
  %s20 = sld [smem:[#allocation0]]
  $region122: #{scconv_layer_forward.1} parent=0
    _
  %s22 = ssub.s32 1, %s20
  %s23 = scalar_select 0, %s22, %s20
  $region1: #{scconv_layer_forward.1} parent=0
    #allocation2 [shape = 'u8[4096]{0}', space=vmem, size = 0x1000, scoped, tag = 'input window, operand 0, single buffered']
    #allocation3 [shape = 's32[1]{0}', space=sflag, size = 0x4, scoped, tag = 'scoped memory for scconv_layer_forward.1']
    #allocation4 [shape = 's32[1]{0}', space=sflag, size = 0x4, scoped, tag = 'scoped memory for scconv_layer_forward.1']
    #allocation5 [shape = 'u8[8192]{0}', space=vmem, size = 0x2000, scoped, tag = 'input window, operand 3, single buffered']
    #allocation6 [shape = 's32[1]{0}', space=sflag, size = 0x4, scoped, tag = 'scoped memory for scconv_layer_forward.1']
    #allocation7 [shape = 'u8[1024]{0}', space=vmem, size = 0x400, scoped, tag = 'input window, operand 4, single buffered']
    #allocation8 [shape = 'u8[1536]{0}', space=vmem, size = 0x800, scoped, tag = 'input window, operand 6, single buffered']
    #allocation9 [shape = 's32[1]{0}', space=sflag, size = 0x4, scoped, tag = 'scoped memory for scconv_layer_forward.1']
    #allocation10 [shape = 'u8[4096]{0}', space=vmem, size = 0x1000, scoped, tag = 'input window, operand 7, single buffered']
    #allocation11 [shape = 'u8[1024]{0}', space=vmem, size = 0x400, scoped, tag = 'input window, operand 8, single buffered']
    #allocation12 [shape = 's32[1]{0}', space=sflag, size = 0x4, scoped, tag = 'scoped memory for scconv_layer_forward.1']
    #allocation13 [shape = 'u8[4096]{0}', space=vmem, size = 0x1000, scoped, tag = 'input window, operand 9, single buffered']
    #allocation14 [shape = 'u8[4096]{0}', space=vmem, size = 0x1000, scoped, tag = 'input window, operand 11, single buffered']
    #allocation15 [shape = 's32[1]{0}', space=sflag, size = 0x4, scoped, tag = 'scoped memory for scconv_layer_forward.1']
    #allocation16 [shape = 'u8[4096]{0}', space=vmem, size = 0x1000, scoped, tag = 'output window, operand 0, single buffered']
    #allocation17 [shape = 'u8[8192]{0}', space=vmem, size = 0x2000, scoped, tag = 'output window, operand 1, single buffered']
    #allocation18 [shape = 's32[1]{0}', space=sflag, size = 0x4, scoped, tag = 'scoped memory for scconv_layer_forward.1']
    #allocation19 [shape = 'u8[4096]{0}', space=vmem, size = 0x1000, scoped, tag = 'output window, operand 2, single buffered']
    %24 = vsyncpa [#allocation3], 0
    %25 = vsyncpa [#allocation6], 0
    %26 = vsyncpa [#allocation9], 0
    %27 = vsyncpa [#allocation12], 0
    %28 = vsyncpa [#allocation15], 0
    %29 = vsyncpa [#allocation4], 0
    %30 = vsyncpa [#allocation18], 0
    // Predicated region
    $region2: #{scconv_layer_forward.1} parent=1 // pred_check
      _
    $region3: #{scconv_layer_forward.1} parent=1 // pred_check_branch
      %32 = sbr.rel (0) target = $region5
    $region4: #{scconv_layer_forward.1} parent=1 // pred_region
      %s34 = ssub.s32 128, 128
      %35 = vsyncadd [#allocation3], %s34
      %s37 = sshll.u32 [#allocation2], 4
      %s38 = int_to_ptr.vmem [resolvable:$true] %s37
      %40 = dma.hbm_to_vmem [thread:$0]  %s0, 128, %s38, [#allocation3]
    $region5: #{scconv_layer_forward.1} parent=1 // pred_fallthru
      _
    // Predicated region
    $region6: #{scconv_layer_forward.1} parent=1 // pred_check
      _
    $region7: #{scconv_layer_forward.1} parent=1 // pred_check_branch
      %42 = sbr.rel (0) target = $region9
    $region8: #{scconv_layer_forward.1} parent=1 // pred_region
      _
    $region9: #{scconv_layer_forward.1} parent=1 // pred_fallthru
      _
    // Predicated region
    $region10: #{scconv_layer_forward.1} parent=1 // pred_check
      _
    $region11: #{scconv_layer_forward.1} parent=1 // pred_check_branch
      %44 = sbr.rel (0) target = $region13
    $region12: #{scconv_layer_forward.1} parent=1 // pred_region
      _
    $region13: #{scconv_layer_forward.1} parent=1 // pred_fallthru
      _
    // Predicated region
    $region14: #{scconv_layer_forward.1} parent=1 // pred_check
      _
    $region15: #{scconv_layer_forward.1} parent=1 // pred_check_branch
      %46 = sbr.rel (0) target = $region17
    $region16: #{scconv_layer_forward.1} parent=1 // pred_region
      %s48 = ssub.s32 256, 256
      %49 = vsyncadd [#allocation6], %s48
      %s51 = sshll.u32 [#allocation5], 4
      %s52 = int_to_ptr.vmem [resolvable:$true] %s51
      %54 = dma.hbm_to_vmem [thread:$0]  %s3, 256, %s52, [#allocation6]
    $region17: #{scconv_layer_forward.1} parent=1 // pred_fallthru
      _
    // Predicated region
    $region18: #{scconv_layer_forward.1} parent=1 // pred_check
      _
    $region19: #{scconv_layer_forward.1} parent=1 // pred_check_branch
      %56 = sbr.rel (0) target = $region21
    $region20: #{scconv_layer_forward.1} parent=1 // pred_region
      %s58 = ssub.s32 32, 32
      %59 = vsyncadd [#allocation6], %s58
      %s61 = sshll.u32 [#allocation7], 4
      %s62 = int_to_ptr.vmem [resolvable:$true] %s61
      %64 = dma.hbm_to_vmem [thread:$0]  %s4, 32, %s62, [#allocation6]
    $region21: #{scconv_layer_forward.1} parent=1 // pred_fallthru
      _
    // Predicated region
    $region22: #{scconv_layer_forward.1} parent=1 // pred_check
      _
    $region23: #{scconv_layer_forward.1} parent=1 // pred_check_branch
      %66 = sbr.rel (0) target = $region25
    $region24: #{scconv_layer_forward.1} parent=1 // pred_region
      _
    $region25: #{scconv_layer_forward.1} parent=1 // pred_fallthru
      _
    // Predicated region
    $region26: #{scconv_layer_forward.1} parent=1 // pred_check
      _
    $region27: #{scconv_layer_forward.1} parent=1 // pred_check_branch
      %68 = sbr.rel (0) target = $region29
    $region28: #{scconv_layer_forward.1} parent=1 // pred_region
      %s70 = ssub.s32 48, 48
      %71 = vsyncadd [#allocation9], %s70
      %s73 = sshll.u32 [#allocation8], 4
      %s74 = int_to_ptr.vmem [resolvable:$true] %s73
      %76 = dma.hbm_to_vmem [thread:$0]  %s6, 48, %s74, [#allocation9]
    $region29: #{scconv_layer_forward.1} parent=1 // pred_fallthru
      _
    // Predicated region
    $region30: #{scconv_layer_forward.1} parent=1 // pred_check
      _
    $region31: #{scconv_layer_forward.1} parent=1 // pred_check_branch
      %78 = sbr.rel (0) target = $region33
    $region32: #{scconv_layer_forward.1} parent=1 // pred_region
      %s80 = ssub.s32 128, 128
      %81 = vsyncadd [#allocation9], %s80
      %s83 = sshll.u32 [#allocation10], 4
      %s84 = int_to_ptr.vmem [resolvable:$true] %s83
      %86 = dma.hbm_to_vmem [thread:$0]  %s7, 128, %s84, [#allocation9]
    $region33: #{scconv_layer_forward.1} parent=1 // pred_fallthru
      _
    // Predicated region
    $region34: #{scconv_layer_forward.1} parent=1 // pred_check
      _
    $region35: #{scconv_layer_forward.1} parent=1 // pred_check_branch
      %88 = sbr.rel (0) target = $region37
    $region36: #{scconv_layer_forward.1} parent=1 // pred_region
      %s90 = ssub.s32 32, 32
      %91 = vsyncadd [#allocation12], %s90
      %s93 = sshll.u32 [#allocation11], 4
      %s94 = int_to_ptr.vmem [resolvable:$true] %s93
      %96 = dma.hbm_to_vmem [thread:$0]  %s8, 32, %s94, [#allocation12]
    $region37: #{scconv_layer_forward.1} parent=1 // pred_fallthru
      _
    // Predicated region
    $region38: #{scconv_layer_forward.1} parent=1 // pred_check
      _
    $region39: #{scconv_layer_forward.1} parent=1 // pred_check_branch
      %98 = sbr.rel (0) target = $region41
    $region40: #{scconv_layer_forward.1} parent=1 // pred_region
      %s100 = ssub.s32 128, 128
      %101 = vsyncadd [#allocation12], %s100
      %s103 = sshll.u32 [#allocation13], 4
      %s104 = int_to_ptr.vmem [resolvable:$true] %s103
      %106 = dma.hbm_to_vmem [thread:$0]  %s9, 128, %s104, [#allocation12]
    $region41: #{scconv_layer_forward.1} parent=1 // pred_fallthru
      _
    // Predicated region
    $region42: #{scconv_layer_forward.1} parent=1 // pred_check
      _
    $region43: #{scconv_layer_forward.1} parent=1 // pred_check_branch
      %108 = sbr.rel (0) target = $region45
    $region44: #{scconv_layer_forward.1} parent=1 // pred_region
      _
    $region45: #{scconv_layer_forward.1} parent=1 // pred_fallthru
      _
    // Predicated region
    $region46: #{scconv_layer_forward.1} parent=1 // pred_check
      _
    $region47: #{scconv_layer_forward.1} parent=1 // pred_check_branch
      %110 = sbr.rel (0) target = $region49
    $region48: #{scconv_layer_forward.1} parent=1 // pred_region
      %s112 = ssub.s32 128, 128
      %113 = vsyncadd [#allocation15], %s112
      %s115 = sshll.u32 [#allocation14], 4
      %s116 = int_to_ptr.vmem [resolvable:$true] %s115
      %118 = dma.hbm_to_vmem [thread:$0]  %s11, 128, %s116, [#allocation15]
    $region49: #{scconv_layer_forward.1} parent=1 // pred_fallthru
      _
    // Predicated region
    $region50: #{scconv_layer_forward.1} parent=1 // pred_check
      _
    $region51: #{scconv_layer_forward.1} parent=1 // pred_check_branch
      %120 = sbr.rel (0) target = $region53
    $region52: #{scconv_layer_forward.1} parent=1 // pred_region
      _
    $region53: #{scconv_layer_forward.1} parent=1 // pred_fallthru
      _
    // Predicated region
    $region54: #{scconv_layer_forward.1} parent=1 // pred_check
      _
    $region55: #{scconv_layer_forward.1} parent=1 // pred_check_branch
      %122 = sbr.rel (0) target = $region57
    $region56: #{scconv_layer_forward.1} parent=1 // pred_region
      _
    $region57: #{scconv_layer_forward.1} parent=1 // pred_fallthru
      _
    // Predicated region
    $region58: #{scconv_layer_forward.1} parent=1 // pred_check
      _
    $region59: #{scconv_layer_forward.1} parent=1 // pred_check_branch
      %124 = sbr.rel (0) target = $region61
    $region60: #{scconv_layer_forward.1} parent=1 // pred_region
      _
    $region61: #{scconv_layer_forward.1} parent=1 // pred_fallthru
      _
    // Predicated region
    $region62: #{scconv_layer_forward.1} parent=1 // pred_check
      _
    $region63: #{scconv_layer_forward.1} parent=1 // pred_check_branch
      %126 = sbr.rel (0) target = $region65
    $region64: #{scconv_layer_forward.1} parent=1 // pred_region
      _
    $region65: #{scconv_layer_forward.1} parent=1 // pred_fallthru
      _
    // Predicated region
    $region66: #{scconv_layer_forward.1} parent=1 // pred_check
      _
    $region67: #{scconv_layer_forward.1} parent=1 // pred_check_branch
      %128 = sbr.rel (0) target = $region69
    $region68: #{scconv_layer_forward.1} parent=1 // pred_region
      %129 = dma.done [#allocation3], 128
    $region69: #{scconv_layer_forward.1} parent=1 // pred_fallthru
      _
    // Predicated region
    $region70: #{scconv_layer_forward.1} parent=1 // pred_check
      _
    $region71: #{scconv_layer_forward.1} parent=1 // pred_check_branch
      %131 = sbr.rel (0) target = $region73
    $region72: #{scconv_layer_forward.1} parent=1 // pred_region
      %132 = dma.done [#allocation6], 256
    $region73: #{scconv_layer_forward.1} parent=1 // pred_fallthru
      _
    // Predicated region
    $region74: #{scconv_layer_forward.1} parent=1 // pred_check
      _
    $region75: #{scconv_layer_forward.1} parent=1 // pred_check_branch
      %134 = sbr.rel (0) target = $region77
    $region76: #{scconv_layer_forward.1} parent=1 // pred_region
      %135 = dma.done [#allocation6], 32
    $region77: #{scconv_layer_forward.1} parent=1 // pred_fallthru
      _
    // Predicated region
    $region78: #{scconv_layer_forward.1} parent=1 // pred_check
      _
    $region79: #{scconv_layer_forward.1} parent=1 // pred_check_branch
      %137 = sbr.rel (0) target = $region81
    $region80: #{scconv_layer_forward.1} parent=1 // pred_region
      %138 = dma.done [#allocation9], 48
    $region81: #{scconv_layer_forward.1} parent=1 // pred_fallthru
      _
    // Predicated region
    $region82: #{scconv_layer_forward.1} parent=1 // pred_check
      _
    $region83: #{scconv_layer_forward.1} parent=1 // pred_check_branch
      %140 = sbr.rel (0) target = $region85
    $region84: #{scconv_layer_forward.1} parent=1 // pred_region
      %141 = dma.done [#allocation9], 128
    $region85: #{scconv_layer_forward.1} parent=1 // pred_fallthru
      _
    // Predicated region
    $region86: #{scconv_layer_forward.1} parent=1 // pred_check
      _
    $region87: #{scconv_layer_forward.1} parent=1 // pred_check_branch
      %143 = sbr.rel (0) target = $region89
    $region88: #{scconv_layer_forward.1} parent=1 // pred_region
      %144 = dma.done [#allocation12], 32
    $region89: #{scconv_layer_forward.1} parent=1 // pred_fallthru
      _
    // Predicated region
    $region90: #{scconv_layer_forward.1} parent=1 // pred_check
      _
    $region91: #{scconv_layer_forward.1} parent=1 // pred_check_branch
      %146 = sbr.rel (0) target = $region93
    $region92: #{scconv_layer_forward.1} parent=1 // pred_region
      %147 = dma.done [#allocation12], 128
    $region93: #{scconv_layer_forward.1} parent=1 // pred_fallthru
      _
    // Predicated region
    $region94: #{scconv_layer_forward.1} parent=1 // pred_check
      _
    $region95: #{scconv_layer_forward.1} parent=1 // pred_check_branch
      %149 = sbr.rel (0) target = $region97
    $region96: #{scconv_layer_forward.1} parent=1 // pred_region
      %150 = dma.done [#allocation15], 128
    $region97: #{scconv_layer_forward.1} parent=1 // pred_fallthru
      _
    %v151 = vld [vmem:[#allocation2] sm:$0xff]
    %v152 = vld [vmem:[#allocation5] sm:$0x3f]
    %v153 = vld [vmem:[#allocation5 + $0x8] sm:$0x3f]
    %v154 = vld [vmem:[#allocation7] sm:$0x3]
    %v156 = vlaneseq
    %v157 = vshrl.u32 %v156, 7
    %v158 = vsub.s32 0, %v157
    %v159 = vrot.slane %v154, %v158
    %v160 = vlaneseq
    %v161 = vshrl.u32 %v160, 7
    %v162 = vsub.s32 1, %v161
    %v163 = vrot.slane %v154, %v162
    %vm166 = vcmask 48128
    %v168 = vsel %vm166, %v151, 0
    %vm170 = vcmask 1045504
    %v172 = vsel %vm170, %v152, 0
    %v175 = vsel %vm170, %v153, 0
    %177 = vmatprep.subr.mxu0 %v175
    %178 = vmatpush1.msra.mxu0 %v172
    %179 = vmatprep.subr.mxu0 0.0
    %180 = vmatpush1.msra.mxu0 0.0
    %181 = vmatprep.subr.mxu0 0.0
    %182 = vmatpush1.msra.mxu0 0.0
    %183 = vmatprep.subr.mxu0 0.0
    %184 = vmatpush1.msra.mxu0 0.0
    %185 = vmatprep.subr.mxu0 0.0
    %186 = vmatpush1.msra.mxu0 0.0
    %187 = vmatprep.subr.mxu0 0.0
    %188 = vmatpush1.msra.mxu0 0.0
    %189 = vmatprep.subr.mxu0 0.0
    %190 = vmatpush1.msra.mxu0 0.0
    %191 = vmatprep.subr.mxu0 0.0
    %192 = vmatpush1.msra.mxu0 0.0
    %193 = vmatprep.subr.mxu0 0.0
    %194 = vmatpush1.msra.mxu0 0.0
    %195 = vmatprep.subr.mxu0 0.0
    %196 = vmatpush1.msra.mxu0 0.0
    %197 = vmatprep.subr.mxu0 0.0
    %198 = vmatpush1.msra.mxu0 0.0
    %199 = vmatprep.subr.mxu0 0.0
    %200 = vmatpush1.msra.mxu0 0.0
    %201 = vmatprep.subr.mxu0 0.0
    %202 = vmatpush1.msra.mxu0 0.0
    %203 = vmatprep.subr.mxu0 0.0
    %204 = vmatpush1.msra.mxu0 0.0
    %205 = vmatprep.subr.mxu0 0.0
    %206 = vmatpush1.msra.mxu0 0.0
    %207 = vmatprep.subr.mxu0 0.0
    %208 = vmatpush1.msra.mxu0 0.0
    %209 = vmatprep.subr.mxu0 0.0
    %210 = vmatpush1.msra.mxu0 0.0
    %211 = vmatprep.subr.mxu0 0.0
    %212 = vmatpush1.msra.mxu0 0.0
    %213 = vmatprep.subr.mxu0 0.0
    %214 = vmatpush1.msra.mxu0 0.0
    %215 = vmatprep.subr.mxu0 0.0
    %216 = vmatpush1.msra.mxu0 0.0
    %217 = vmatprep.subr.mxu0 0.0
    %218 = vmatpush1.msra.mxu0 0.0
    %219 = vmatprep.subr.mxu0 0.0
    %220 = vmatpush1.msra.mxu0 0.0
    %221 = vmatprep.subr.mxu0 0.0
    %222 = vmatpush1.msra.mxu0 0.0
    %223 = vmatprep.subr.mxu0 0.0
    %224 = vmatpush1.msra.mxu0 0.0
    %225 = vmatprep.subr.mxu0 0.0
    %226 = vmatpush1.msra.mxu0 0.0
    %227 = vmatprep.subr.mxu0 0.0
    %228 = vmatpush1.msra.mxu0 0.0
    %229 = vmatprep.subr.mxu0 0.0
    %230 = vmatpush1.msra.mxu0 0.0
    %231 = vmatprep.subr.mxu0 0.0
    %232 = vmatpush1.msra.mxu0 0.0
    %233 = vmatprep.subr.mxu0 0.0
    %234 = vmatpush1.msra.mxu0 0.0
    %235 = vmatprep.subr.mxu0 0.0
    %236 = vmatpush1.msra.mxu0 0.0
    %237 = vmatprep.subr.mxu0 0.0
    %238 = vmatpush1.msra.mxu0 0.0
    %239 = vmatprep.subr.mxu0 0.0
    %240 = vmatpush1.msra.mxu0 0.0
    %241 = vmatprep.mubr.f32.mxu0 0.0
    %242 = vmatmul.mubr.f32.gmra.mrb[0].mxu0 %v168
    %v243 = vpop.f32.mrb[0].mxu0
    %v244 = vadd.f32 %v159, %v243
    %v245 = vpop.f32.mrb[0].mxu0
    %v246 = vadd.f32 %v163, %v245
    %247 = vdwg.mxu0
    %v248 = vld [vmem:[%s1] sm:$0xff]
    %v249 = vld [vmem:[%s1 + $0x8] sm:$0xf]
    %v250 = vld [vmem:[%s5] sm:$0xff]
    %v251 = vld [vmem:[%s5 + $0x8] sm:$0xff]
    %v252 = vld [vmem:[%s5 + $0x10] sm:$0xff]
    %v253 = vld [vmem:[%s5 + $0x18] sm:$0x3]
    %v254 = vld [vmem:[%s5 + $0x20] sm:$0x3]
    %v255 = vld [vmem:[%s5 + $0x28] sm:$0x3]
    %v256 = vld [vmem:[#allocation8] sm:$0x7]
    %v258 = vlaneseq
    %v259 = vshrl.u32 %v258, 7
    %v260 = vsub.s32 0, %v259
    %v261 = vrot.slane %v256, %v260
    %v262 = vlaneseq
    %v263 = vshrl.u32 %v262, 7
    %v264 = vsub.s32 1, %v263
    %v265 = vrot.slane %v256, %v264
    %v266 = vlaneseq
    %v267 = vshrl.u32 %v266, 7
    %v268 = vsub.s32 2, %v267
    %v269 = vrot.slane %v256, %v268
    %vm273 = vcmask 80896
    %v275 = vsel %vm273, %v248, 0
    %v278 = vsel %vm273, %v249, 0
    %vm280 = vcmask 1041408
    %v282 = vsel %vm280, %v253, 0
    %v285 = vsel %vm280, %v254, 0
    %v288 = vsel %vm280, %v255, 0
    %290 = vmatprep.subr.mxu0 %v251
    %291 = vmatpush1.msra.mxu0 %v250
    %292 = vmatprep.subr.mxu0 %v285
    %293 = vmatpush1.msra.mxu0 %v282
    %294 = vmatprep.subr.mxu0 0.0
    %295 = vmatpush1.msra.mxu0 0.0
    %296 = vmatprep.subr.mxu0 0.0
    %297 = vmatpush1.msra.mxu0 0.0
    %298 = vmatprep.subr.mxu0 0.0
    %299 = vmatpush1.msra.mxu0 0.0
    %300 = vmatprep.subr.mxu0 0.0
    %301 = vmatpush1.msra.mxu0 0.0
    %302 = vmatprep.subr.mxu0 0.0
    %303 = vmatpush1.msra.mxu0 0.0
    %304 = vmatprep.subr.mxu0 0.0
    %305 = vmatpush1.msra.mxu0 0.0
    %306 = vmatprep.subr.mxu0 0.0
    %307 = vmatpush1.msra.mxu0 0.0
    %308 = vmatprep.subr.mxu0 0.0
    %309 = vmatpush1.msra.mxu0 0.0
    %310 = vmatprep.subr.mxu0 0.0
    %311 = vmatpush1.msra.mxu0 0.0
    %312 = vmatprep.subr.mxu0 0.0
    %313 = vmatpush1.msra.mxu0 0.0
    %314 = vmatprep.subr.mxu0 0.0
    %315 = vmatpush1.msra.mxu0 0.0
    %316 = vmatprep.subr.mxu0 0.0
    %317 = vmatpush1.msra.mxu0 0.0
    %318 = vmatprep.subr.mxu0 0.0
    %319 = vmatpush1.msra.mxu0 0.0
    %320 = vmatprep.subr.mxu0 0.0
    %321 = vmatpush1.msra.mxu0 0.0
    %322 = vmatprep.subr.mxu0 0.0
    %323 = vmatpush1.msra.mxu0 0.0
    %324 = vmatprep.subr.mxu0 0.0
    %325 = vmatpush1.msra.mxu0 0.0
    %326 = vmatprep.subr.mxu0 0.0
    %327 = vmatpush1.msra.mxu0 0.0
    %328 = vmatprep.subr.mxu0 0.0
    %329 = vmatpush1.msra.mxu0 0.0
    %330 = vmatprep.subr.mxu0 0.0
    %331 = vmatpush1.msra.mxu0 0.0
    %332 = vmatprep.subr.mxu0 0.0
    %333 = vmatpush1.msra.mxu0 0.0
    %334 = vmatprep.subr.mxu0 0.0
    %335 = vmatpush1.msra.mxu0 0.0
    %336 = vmatprep.subr.mxu0 0.0
    %337 = vmatpush1.msra.mxu0 0.0
    %338 = vmatprep.subr.mxu0 0.0
    %339 = vmatpush1.msra.mxu0 0.0
    %340 = vmatprep.subr.mxu0 0.0
    %341 = vmatpush1.msra.mxu0 0.0
    %342 = vmatprep.subr.mxu0 0.0
    %343 = vmatpush1.msra.mxu0 0.0
    %344 = vmatprep.subr.mxu0 0.0
    %345 = vmatpush1.msra.mxu0 0.0
    %346 = vmatprep.subr.mxu0 0.0
    %347 = vmatpush1.msra.mxu0 0.0
    %348 = vmatprep.subr.mxu0 0.0
    %349 = vmatpush1.msra.mxu0 0.0
    %350 = vmatprep.subr.mxu0 0.0
    %351 = vmatpush1.msra.mxu0 0.0
    %352 = vmatprep.subr.mxu0 0.0
    %353 = vmatpush1.msra.mxu0 0.0
    %354 = vmatprep.mubr.f32.mxu0 0.0
    %355 = vmatmul.mubr.f32.gmra.mrb[0].mxu0 %v275
    %v356 = vpop.f32.mrb[0].mxu0
    %v357 = vadd.f32 %v261, %v356
    %v358 = vpop.f32.mrb[0].mxu0
    %v359 = vadd.f32 %v265, %v358
    %360 = vmatprep.mubr.f32.mxu0 0.0
    %361 = vmatmul.mubr.f32.gmra.mrb[0].mxu0 %v278
    %v362 = vpop.f32.mrb[0].mxu0
    %v363 = vadd.f32 %v261, %v362
    %v364 = vpop.f32.mrb[0].mxu0
    %v365 = vadd.f32 %v265, %v364
    %366 = vdwg.mxu0
    %367 = vmatprep.subr.mxu0 0.0
    %368 = vmatpush1.msra.mxu0 %v252
    %369 = vmatprep.subr.mxu0 0.0
    %370 = vmatpush1.msra.mxu0 %v288
    %371 = vmatprep.subr.mxu0 0.0
    %372 = vmatpush1.msra.mxu0 0.0
    %373 = vmatprep.subr.mxu0 0.0
    %374 = vmatpush1.msra.mxu0 0.0
    %375 = vmatprep.subr.mxu0 0.0
    %376 = vmatpush1.msra.mxu0 0.0
    %377 = vmatprep.subr.mxu0 0.0
    %378 = vmatpush1.msra.mxu0 0.0
    %379 = vmatprep.subr.mxu0 0.0
    %380 = vmatpush1.msra.mxu0 0.0
    %381 = vmatprep.subr.mxu0 0.0
    %382 = vmatpush1.msra.mxu0 0.0
    %383 = vmatprep.subr.mxu0 0.0
    %384 = vmatpush1.msra.mxu0 0.0
    %385 = vmatprep.subr.mxu0 0.0
    %386 = vmatpush1.msra.mxu0 0.0
    %387 = vmatprep.subr.mxu0 0.0
    %388 = vmatpush1.msra.mxu0 0.0
    %389 = vmatprep.subr.mxu0 0.0
    %390 = vmatpush1.msra.mxu0 0.0
    %391 = vmatprep.subr.mxu0 0.0
    %392 = vmatpush1.msra.mxu0 0.0
    %393 = vmatprep.subr.mxu0 0.0
    %394 = vmatpush1.msra.mxu0 0.0
    %395 = vmatprep.subr.mxu0 0.0
    %396 = vmatpush1.msra.mxu0 0.0
    %397 = vmatprep.subr.mxu0 0.0
    %398 = vmatpush1.msra.mxu0 0.0
    %399 = vmatprep.subr.mxu0 0.0
    %400 = vmatpush1.msra.mxu0 0.0
    %401 = vmatprep.subr.mxu0 0.0
    %402 = vmatpush1.msra.mxu0 0.0
    %403 = vmatprep.subr.mxu0 0.0
    %404 = vmatpush1.msra.mxu0 0.0
    %405 = vmatprep.subr.mxu0 0.0
    %406 = vmatpush1.msra.mxu0 0.0
    %407 = vmatprep.subr.mxu0 0.0
    %408 = vmatpush1.msra.mxu0 0.0
    %409 = vmatprep.subr.mxu0 0.0
    %410 = vmatpush1.msra.mxu0 0.0
    %411 = vmatprep.subr.mxu0 0.0
    %412 = vmatpush1.msra.mxu0 0.0
    %413 = vmatprep.subr.mxu0 0.0
    %414 = vmatpush1.msra.mxu0 0.0
    %415 = vmatprep.subr.mxu0 0.0
    %416 = vmatpush1.msra.mxu0 0.0
    %417 = vmatprep.subr.mxu0 0.0
    %418 = vmatpush1.msra.mxu0 0.0
    %419 = vmatprep.subr.mxu0 0.0
    %420 = vmatpush1.msra.mxu0 0.0
    %421 = vmatprep.subr.mxu0 0.0
    %422 = vmatpush1.msra.mxu0 0.0
    %423 = vmatprep.subr.mxu0 0.0
    %424 = vmatpush1.msra.mxu0 0.0
    %425 = vmatprep.subr.mxu0 0.0
    %426 = vmatpush1.msra.mxu0 0.0
    %427 = vmatprep.subr.mxu0 0.0
    %428 = vmatpush1.msra.mxu0 0.0
    %429 = vmatprep.subr.mxu0 0.0
    %430 = vmatpush1.msra.mxu0 0.0
    %431 = vmatprep.mubr.f32.mxu0 0.0
    %432 = vmatmul.mubr.f32.gmra.mrb[0].mxu0 %v275
    %v433 = vpop.f32.mrb[0].mxu0
    %v434 = vadd.f32 %v269, %v433
    %v435 = vpop.f32.mrb[0].mxu0
    %436 = vmatprep.mubr.f32.mxu0 0.0
    %437 = vmatmul.mubr.f32.gmra.mrb[0].mxu0 %v278
    %v438 = vpop.f32.mrb[0].mxu0
    %v439 = vadd.f32 %v269, %v438
    %v440 = vpop.f32.mrb[0].mxu0
    %441 = vdwg.mxu0
    %v442 = vld [vmem:[%s2] sm:$0x1f]
    %v443 = vld [vmem:[#allocation10] sm:$0xff]
    %v444 = vld [vmem:[#allocation11] sm:$0x3]
    %v446 = vlaneseq
    %v447 = vshrl.u32 %v446, 7
    %v448 = vsub.s32 0, %v447
    %v449 = vrot.slane %v444, %v448
    %v450 = vlaneseq
    %v451 = vshrl.u32 %v450, 7
    %v452 = vsub.s32 1, %v451
    %v453 = vrot.slane %v444, %v452
    %v457 = vcombine.high %v443, %v443
    %vm458 = vcmask 31744
    %v460 = vsel %vm458, %v442, 0
    %vm462 = vcmask 1043456
    %v463 = vsel %vm462, %v443, 0
    %v465 = vsel %vm462, %v457, 0
    %467 = vmatprep.subr.mxu0 %v465
    %468 = vmatpush1.msra.mxu0 %v463
    %469 = vmatprep.subr.mxu0 0.0
    %470 = vmatpush1.msra.mxu0 0.0
    %471 = vmatprep.subr.mxu0 0.0
    %472 = vmatpush1.msra.mxu0 0.0
    %473 = vmatprep.subr.mxu0 0.0
    %474 = vmatpush1.msra.mxu0 0.0
    %475 = vmatprep.subr.mxu0 0.0
    %476 = vmatpush1.msra.mxu0 0.0
    %477 = vmatprep.subr.mxu0 0.0
    %478 = vmatpush1.msra.mxu0 0.0
    %479 = vmatprep.subr.mxu0 0.0
    %480 = vmatpush1.msra.mxu0 0.0
    %481 = vmatprep.subr.mxu0 0.0
    %482 = vmatpush1.msra.mxu0 0.0
    %483 = vmatprep.subr.mxu0 0.0
    %484 = vmatpush1.msra.mxu0 0.0
    %485 = vmatprep.subr.mxu0 0.0
    %486 = vmatpush1.msra.mxu0 0.0
    %487 = vmatprep.subr.mxu0 0.0
    %488 = vmatpush1.msra.mxu0 0.0
    %489 = vmatprep.subr.mxu0 0.0
    %490 = vmatpush1.msra.mxu0 0.0
    %491 = vmatprep.subr.mxu0 0.0
    %492 = vmatpush1.msra.mxu0 0.0
    %493 = vmatprep.subr.mxu0 0.0
    %494 = vmatpush1.msra.mxu0 0.0
    %495 = vmatprep.subr.mxu0 0.0
    %496 = vmatpush1.msra.mxu0 0.0
    %497 = vmatprep.subr.mxu0 0.0
    %498 = vmatpush1.msra.mxu0 0.0
    %499 = vmatprep.subr.mxu0 0.0
    %500 = vmatpush1.msra.mxu0 0.0
    %501 = vmatprep.subr.mxu0 0.0
    %502 = vmatpush1.msra.mxu0 0.0
    %503 = vmatprep.subr.mxu0 0.0
    %504 = vmatpush1.msra.mxu0 0.0
    %505 = vmatprep.subr.mxu0 0.0
    %506 = vmatpush1.msra.mxu0 0.0
    %507 = vmatprep.subr.mxu0 0.0
    %508 = vmatpush1.msra.mxu0 0.0
    %509 = vmatprep.subr.mxu0 0.0
    %510 = vmatpush1.msra.mxu0 0.0
    %511 = vmatprep.subr.mxu0 0.0
    %512 = vmatpush1.msra.mxu0 0.0
    %513 = vmatprep.subr.mxu0 0.0
    %514 = vmatpush1.msra.mxu0 0.0
    %515 = vmatprep.subr.mxu0 0.0
    %516 = vmatpush1.msra.mxu0 0.0
    %517 = vmatprep.subr.mxu0 0.0
    %518 = vmatpush1.msra.mxu0 0.0
    %519 = vmatprep.subr.mxu0 0.0
    %520 = vmatpush1.msra.mxu0 0.0
    %521 = vmatprep.subr.mxu0 0.0
    %522 = vmatpush1.msra.mxu0 0.0
    %523 = vmatprep.subr.mxu0 0.0
    %524 = vmatpush1.msra.mxu0 0.0
    %525 = vmatprep.subr.mxu0 0.0
    %526 = vmatpush1.msra.mxu0 0.0
    %527 = vmatprep.subr.mxu0 0.0
    %528 = vmatpush1.msra.mxu0 0.0
    %529 = vmatprep.subr.mxu0 0.0
    %530 = vmatpush1.msra.mxu0 0.0
    %531 = vmatprep.mubr.f32.mxu0 0.0
    %532 = vmatmul.mubr.f32.gmra.mrb[0].mxu0 %v460
    %v533 = vpop.f32.mrb[0].mxu0
    %v534 = vadd.f32 %v449, %v533
    %v535 = vpop.f32.mrb[0].mxu0
    %v536 = vadd.f32 %v453, %v535
    %537 = vdwg.mxu0
    %v538 = vld [vmem:[#allocation13] sm:$0xff]
    %v539 = vld [vmem:[%s14] sm:$0xff]
    %vm540 = vcmask 97280
    %v542 = vsel %vm540, %v539, 0
    %v545 = vsel %vm462, %v365, 0
    %547 = vmatprep.subr.mxu0 0.0
    %548 = vmatpush1.msra.mxu0 %v359
    %549 = vmatprep.subr.mxu0 0.0
    %550 = vmatpush1.msra.mxu0 %v545
    %551 = vmatprep.subr.mxu0 0.0
    %552 = vmatpush1.msra.mxu0 0.0
    %553 = vmatprep.subr.mxu0 0.0
    %554 = vmatpush1.msra.mxu0 0.0
    %555 = vmatprep.subr.mxu0 0.0
    %556 = vmatpush1.msra.mxu0 0.0
    %557 = vmatprep.subr.mxu0 0.0
    %558 = vmatpush1.msra.mxu0 0.0
    %559 = vmatprep.subr.mxu0 0.0
    %560 = vmatpush1.msra.mxu0 0.0
    %561 = vmatprep.subr.mxu0 0.0
    %562 = vmatpush1.msra.mxu0 0.0
    %563 = vmatprep.subr.mxu0 0.0
    %564 = vmatpush1.msra.mxu0 0.0
    %565 = vmatprep.subr.mxu0 0.0
    %566 = vmatpush1.msra.mxu0 0.0
    %567 = vmatprep.subr.mxu0 0.0
    %568 = vmatpush1.msra.mxu0 0.0
    %569 = vmatprep.subr.mxu0 0.0
    %570 = vmatpush1.msra.mxu0 0.0
    %571 = vmatprep.subr.mxu0 0.0
    %572 = vmatpush1.msra.mxu0 0.0
    %573 = vmatprep.subr.mxu0 0.0
    %574 = vmatpush1.msra.mxu0 0.0
    %575 = vmatprep.subr.mxu0 0.0
    %576 = vmatpush1.msra.mxu0 0.0
    %577 = vmatprep.subr.mxu0 0.0
    %578 = vmatpush1.msra.mxu0 0.0
    %579 = vmatprep.subr.mxu0 0.0
    %580 = vmatpush1.msra.mxu0 0.0
    %581 = vmatprep.subr.mxu0 0.0
    %582 = vmatpush1.msra.mxu0 0.0
    %583 = vmatprep.subr.mxu0 0.0
    %584 = vmatpush1.msra.mxu0 0.0
    %585 = vmatprep.subr.mxu0 0.0
    %586 = vmatpush1.msra.mxu0 0.0
    %587 = vmatprep.subr.mxu0 0.0
    %588 = vmatpush1.msra.mxu0 0.0
    %589 = vmatprep.subr.mxu0 0.0
    %590 = vmatpush1.msra.mxu0 0.0
    %591 = vmatprep.subr.mxu0 0.0
    %592 = vmatpush1.msra.mxu0 0.0
    %593 = vmatprep.subr.mxu0 0.0
    %594 = vmatpush1.msra.mxu0 0.0
    %595 = vmatprep.subr.mxu0 0.0
    %596 = vmatpush1.msra.mxu0 0.0
    %597 = vmatprep.subr.mxu0 0.0
    %598 = vmatpush1.msra.mxu0 0.0
    %599 = vmatprep.subr.mxu0 0.0
    %600 = vmatpush1.msra.mxu0 0.0
    %601 = vmatprep.subr.mxu0 0.0
    %602 = vmatpush1.msra.mxu0 0.0
    %603 = vmatprep.subr.mxu0 0.0
    %604 = vmatpush1.msra.mxu0 0.0
    %605 = vmatprep.subr.mxu0 0.0
    %606 = vmatpush1.msra.mxu0 0.0
    %607 = vmatprep.subr.mxu0 0.0
    %608 = vmatpush1.msra.mxu0 0.0
    %609 = vmatprep.subr.mxu0 0.0
    %610 = vmatpush1.msra.mxu0 0.0
    %611 = vmatprep.mubr.f32.mxu0 0.0
    %612 = vmatmul.mubr.f32.gmra.mrb[0].mxu0 %v542
    %v613 = vpop.f32.mrb[0].mxu0
    %v614 = vadd.f32 0.0, %v613
    %v615 = vpop.f32.mrb[0].mxu0
    %616 = vdwg.mxu0
    %vm617 = vcmask 64512
    %v619 = vsel %vm617, %v538, 0
    %621 = vmatprep.subr.mxu0 0.0
    %622 = vmatpush1.msra.mxu0 %v244
    %623 = vmatprep.subr.mxu0 0.0
    %624 = vmatpush1.msra.mxu0 0.0
    %625 = vmatprep.subr.mxu0 0.0
    %626 = vmatpush1.msra.mxu0 0.0
    %627 = vmatprep.subr.mxu0 0.0
    %628 = vmatpush1.msra.mxu0 0.0
    %629 = vmatprep.subr.mxu0 0.0
    %630 = vmatpush1.msra.mxu0 0.0
    %631 = vmatprep.subr.mxu0 0.0
    %632 = vmatpush1.msra.mxu0 0.0
    %633 = vmatprep.subr.mxu0 0.0
    %634 = vmatpush1.msra.mxu0 0.0
    %635 = vmatprep.subr.mxu0 0.0
    %636 = vmatpush1.msra.mxu0 0.0
    %637 = vmatprep.subr.mxu0 0.0
    %638 = vmatpush1.msra.mxu0 0.0
    %639 = vmatprep.subr.mxu0 0.0
    %640 = vmatpush1.msra.mxu0 0.0
    %641 = vmatprep.subr.mxu0 0.0
    %642 = vmatpush1.msra.mxu0 0.0
    %643 = vmatprep.subr.mxu0 0.0
    %644 = vmatpush1.msra.mxu0 0.0
    %645 = vmatprep.subr.mxu0 0.0
    %646 = vmatpush1.msra.mxu0 0.0
    %647 = vmatprep.subr.mxu0 0.0
    %648 = vmatpush1.msra.mxu0 0.0
    %649 = vmatprep.subr.mxu0 0.0
    %650 = vmatpush1.msra.mxu0 0.0
    %651 = vmatprep.subr.mxu0 0.0
    %652 = vmatpush1.msra.mxu0 0.0
    %653 = vmatprep.subr.mxu0 0.0
    %654 = vmatpush1.msra.mxu0 0.0
    %655 = vmatprep.subr.mxu0 0.0
    %656 = vmatpush1.msra.mxu0 0.0
    %657 = vmatprep.subr.mxu0 0.0
    %658 = vmatpush1.msra.mxu0 0.0
    %659 = vmatprep.subr.mxu0 0.0
    %660 = vmatpush1.msra.mxu0 0.0
    %661 = vmatprep.subr.mxu0 0.0
    %662 = vmatpush1.msra.mxu0 0.0
    %663 = vmatprep.subr.mxu0 0.0
    %664 = vmatpush1.msra.mxu0 0.0
    %665 = vmatprep.subr.mxu0 0.0
    %666 = vmatpush1.msra.mxu0 0.0
    %667 = vmatprep.subr.mxu0 0.0
    %668 = vmatpush1.msra.mxu0 0.0
    %669 = vmatprep.subr.mxu0 0.0
    %670 = vmatpush1.msra.mxu0 0.0
    %671 = vmatprep.subr.mxu0 0.0
    %672 = vmatpush1.msra.mxu0 0.0
    %673 = vmatprep.subr.mxu0 0.0
    %674 = vmatpush1.msra.mxu0 0.0
    %675 = vmatprep.subr.mxu0 0.0
    %676 = vmatpush1.msra.mxu0 0.0
    %677 = vmatprep.subr.mxu0 0.0
    %678 = vmatpush1.msra.mxu0 0.0
    %679 = vmatprep.subr.mxu0 0.0
    %680 = vmatpush1.msra.mxu0 0.0
    %681 = vmatprep.subr.mxu0 0.0
    %682 = vmatpush1.msra.mxu0 0.0
    %683 = vmatprep.subr.mxu0 0.0
    %684 = vmatpush1.msra.mxu0 0.0
    %685 = vmatprep.mubr.f32.mxu0 0.0
    %686 = vmatmul.mubr.f32.gmra.mrb[0].mxu0 %v619
    %v687 = vpop.f32.mrb[0].mxu0
    %v688 = vadd.f32 %v614, %v687
    %v689 = vpop.f32.mrb[0].mxu0
    %690 = vdwg.mxu0
    %v691 = vmax.f32 %v688, 0.0
    %692 = vst [vmem:[#allocation16] sm:$0xff] %v691
    %v693 = vld [vmem:[%s10] sm:$0xff]
    %v694 = vld [vmem:[%s10 + $0x8] sm:$0xf]
    %v695 = vld [vmem:[%s13] sm:$0xff]
    %v696 = vld [vmem:[%s13 + $0x8] sm:$0xf]
    %v698 = vsel %vm617, %v695, 0
    %v701 = vsel %vm617, %v696, 0
    %703 = vmatprep.subr.mxu0 0.0
    %704 = vmatpush1.msra.mxu0 %v246
    %705 = vmatprep.subr.mxu0 0.0
    %706 = vmatpush1.msra.mxu0 0.0
    %707 = vmatprep.subr.mxu0 0.0
    %708 = vmatpush1.msra.mxu0 0.0
    %709 = vmatprep.subr.mxu0 0.0
    %710 = vmatpush1.msra.mxu0 0.0
    %711 = vmatprep.subr.mxu0 0.0
    %712 = vmatpush1.msra.mxu0 0.0
    %713 = vmatprep.subr.mxu0 0.0
    %714 = vmatpush1.msra.mxu0 0.0
    %715 = vmatprep.subr.mxu0 0.0
    %716 = vmatpush1.msra.mxu0 0.0
    %717 = vmatprep.subr.mxu0 0.0
    %718 = vmatpush1.msra.mxu0 0.0
    %719 = vmatprep.subr.mxu0 0.0
    %720 = vmatpush1.msra.mxu0 0.0
    %721 = vmatprep.subr.mxu0 0.0
    %722 = vmatpush1.msra.mxu0 0.0
    %723 = vmatprep.subr.mxu0 0.0
    %724 = vmatpush1.msra.mxu0 0.0
    %725 = vmatprep.subr.mxu0 0.0
    %726 = vmatpush1.msra.mxu0 0.0
    %727 = vmatprep.subr.mxu0 0.0
    %728 = vmatpush1.msra.mxu0 0.0
    %729 = vmatprep.subr.mxu0 0.0
    %730 = vmatpush1.msra.mxu0 0.0
    %731 = vmatprep.subr.mxu0 0.0
    %732 = vmatpush1.msra.mxu0 0.0
    %733 = vmatprep.subr.mxu0 0.0
    %734 = vmatpush1.msra.mxu0 0.0
    %735 = vmatprep.subr.mxu0 0.0
    %736 = vmatpush1.msra.mxu0 0.0
    %737 = vmatprep.subr.mxu0 0.0
    %738 = vmatpush1.msra.mxu0 0.0
    %739 = vmatprep.subr.mxu0 0.0
    %740 = vmatpush1.msra.mxu0 0.0
    %741 = vmatprep.subr.mxu0 0.0
    %742 = vmatpush1.msra.mxu0 0.0
    %743 = vmatprep.subr.mxu0 0.0
    %744 = vmatpush1.msra.mxu0 0.0
    %745 = vmatprep.subr.mxu0 0.0
    %746 = vmatpush1.msra.mxu0 0.0
    %747 = vmatprep.subr.mxu0 0.0
    %748 = vmatpush1.msra.mxu0 0.0
    %749 = vmatprep.subr.mxu0 0.0
    %750 = vmatpush1.msra.mxu0 0.0
    %751 = vmatprep.subr.mxu0 0.0
    %752 = vmatpush1.msra.mxu0 0.0
    %753 = vmatprep.subr.mxu0 0.0
    %754 = vmatpush1.msra.mxu0 0.0
    %755 = vmatprep.subr.mxu0 0.0
    %756 = vmatpush1.msra.mxu0 0.0
    %757 = vmatprep.subr.mxu0 0.0
    %758 = vmatpush1.msra.mxu0 0.0
    %759 = vmatprep.subr.mxu0 0.0
    %760 = vmatpush1.msra.mxu0 0.0
    %761 = vmatprep.subr.mxu0 0.0
    %762 = vmatpush1.msra.mxu0 0.0
    %763 = vmatprep.subr.mxu0 0.0
    %764 = vmatpush1.msra.mxu0 0.0
    %765 = vmatprep.subr.mxu0 0.0
    %766 = vmatpush1.msra.mxu0 0.0
    %767 = vmatprep.mubr.f32.mxu0 0.0
    %768 = vmatmul.mubr.f32.gmra.mrb[0].mxu0 %v698
    %v769 = vpop.f32.mrb[0].mxu0
    %v770 = vadd.f32 0.0, %v769
    %v771 = vpop.f32.mrb[0].mxu0
    %772 = vmatprep.mubr.f32.mxu0 0.0
    %773 = vmatmul.mubr.f32.gmra.mrb[0].mxu0 %v701
    %v774 = vpop.f32.mrb[0].mxu0
    %v775 = vadd.f32 0.0, %v774
    %v776 = vpop.f32.mrb[0].mxu0
    %777 = vdwg.mxu0
    %v779 = vsel %vm540, %v693, 0
    %v782 = vsel %vm540, %v694, 0
    %v785 = vsel %vm462, %v363, 0
    %787 = vmatprep.subr.mxu0 0.0
    %788 = vmatpush1.msra.mxu0 %v357
    %789 = vmatprep.subr.mxu0 0.0
    %790 = vmatpush1.msra.mxu0 %v785
    %791 = vmatprep.subr.mxu0 0.0
    %792 = vmatpush1.msra.mxu0 0.0
    %793 = vmatprep.subr.mxu0 0.0
    %794 = vmatpush1.msra.mxu0 0.0
    %795 = vmatprep.subr.mxu0 0.0
    %796 = vmatpush1.msra.mxu0 0.0
    %797 = vmatprep.subr.mxu0 0.0
    %798 = vmatpush1.msra.mxu0 0.0
    %799 = vmatprep.subr.mxu0 0.0
    %800 = vmatpush1.msra.mxu0 0.0
    %801 = vmatprep.subr.mxu0 0.0
    %802 = vmatpush1.msra.mxu0 0.0
    %803 = vmatprep.subr.mxu0 0.0
    %804 = vmatpush1.msra.mxu0 0.0
    %805 = vmatprep.subr.mxu0 0.0
    %806 = vmatpush1.msra.mxu0 0.0
    %807 = vmatprep.subr.mxu0 0.0
    %808 = vmatpush1.msra.mxu0 0.0
    %809 = vmatprep.subr.mxu0 0.0
    %810 = vmatpush1.msra.mxu0 0.0
    %811 = vmatprep.subr.mxu0 0.0
    %812 = vmatpush1.msra.mxu0 0.0
    %813 = vmatprep.subr.mxu0 0.0
    %814 = vmatpush1.msra.mxu0 0.0
    %815 = vmatprep.subr.mxu0 0.0
    %816 = vmatpush1.msra.mxu0 0.0
    %817 = vmatprep.subr.mxu0 0.0
    %818 = vmatpush1.msra.mxu0 0.0
    %819 = vmatprep.subr.mxu0 0.0
    %820 = vmatpush1.msra.mxu0 0.0
    %821 = vmatprep.subr.mxu0 0.0
    %822 = vmatpush1.msra.mxu0 0.0
    %823 = vmatprep.subr.mxu0 0.0
    %824 = vmatpush1.msra.mxu0 0.0
    %825 = vmatprep.subr.mxu0 0.0
    %826 = vmatpush1.msra.mxu0 0.0
    %827 = vmatprep.subr.mxu0 0.0
    %828 = vmatpush1.msra.mxu0 0.0
    %829 = vmatprep.subr.mxu0 0.0
    %830 = vmatpush1.msra.mxu0 0.0
    %831 = vmatprep.subr.mxu0 0.0
    %832 = vmatpush1.msra.mxu0 0.0
    %833 = vmatprep.subr.mxu0 0.0
    %834 = vmatpush1.msra.mxu0 0.0
    %835 = vmatprep.subr.mxu0 0.0
    %836 = vmatpush1.msra.mxu0 0.0
    %837 = vmatprep.subr.mxu0 0.0
    %838 = vmatpush1.msra.mxu0 0.0
    %839 = vmatprep.subr.mxu0 0.0
    %840 = vmatpush1.msra.mxu0 0.0
    %841 = vmatprep.subr.mxu0 0.0
    %842 = vmatpush1.msra.mxu0 0.0
    %843 = vmatprep.subr.mxu0 0.0
    %844 = vmatpush1.msra.mxu0 0.0
    %845 = vmatprep.subr.mxu0 0.0
    %846 = vmatpush1.msra.mxu0 0.0
    %847 = vmatprep.subr.mxu0 0.0
    %848 = vmatpush1.msra.mxu0 0.0
    %849 = vmatprep.subr.mxu0 0.0
    %850 = vmatpush1.msra.mxu0 0.0
    %851 = vmatprep.mubr.f32.mxu0 0.0
    %852 = vmatmul.mubr.f32.gmra.mrb[0].mxu0 %v779
    %v853 = vpop.f32.mrb[0].mxu0
    %v854 = vadd.f32 %v770, %v853
    %v855 = vpop.f32.mrb[0].mxu0
    %856 = vmatprep.mubr.f32.mxu0 0.0
    %857 = vmatmul.mubr.f32.gmra.mrb[0].mxu0 %v782
    %v858 = vpop.f32.mrb[0].mxu0
    %v859 = vadd.f32 %v775, %v858
    %v860 = vpop.f32.mrb[0].mxu0
    %861 = vdwg.mxu0
    %v862 = vld [vmem:[%s12] sm:$0xff]
    %v863 = vld [vmem:[%s12 + $0x8] sm:$0xf]
    %vm864 = vcmask 39936
    %v866 = vsel %vm864, %v862, 0
    %v869 = vsel %vm864, %v863, 0
    %vm871 = vcmask 1044480
    %v873 = vsel %vm871, %v536, 0
    %875 = vmatprep.subr.mxu0 0.0
    %876 = vmatpush1.msra.mxu0 %v873
    %877 = vmatprep.subr.mxu0 0.0
    %878 = vmatpush1.msra.mxu0 0.0
    %879 = vmatprep.subr.mxu0 0.0
    %880 = vmatpush1.msra.mxu0 0.0
    %881 = vmatprep.subr.mxu0 0.0
    %882 = vmatpush1.msra.mxu0 0.0
    %883 = vmatprep.subr.mxu0 0.0
    %884 = vmatpush1.msra.mxu0 0.0
    %885 = vmatprep.subr.mxu0 0.0
    %886 = vmatpush1.msra.mxu0 0.0
    %887 = vmatprep.subr.mxu0 0.0
    %888 = vmatpush1.msra.mxu0 0.0
    %889 = vmatprep.subr.mxu0 0.0
    %890 = vmatpush1.msra.mxu0 0.0
    %891 = vmatprep.subr.mxu0 0.0
    %892 = vmatpush1.msra.mxu0 0.0
    %893 = vmatprep.subr.mxu0 0.0
    %894 = vmatpush1.msra.mxu0 0.0
    %895 = vmatprep.subr.mxu0 0.0
    %896 = vmatpush1.msra.mxu0 0.0
    %897 = vmatprep.subr.mxu0 0.0
    %898 = vmatpush1.msra.mxu0 0.0
    %899 = vmatprep.subr.mxu0 0.0
    %900 = vmatpush1.msra.mxu0 0.0
    %901 = vmatprep.subr.mxu0 0.0
    %902 = vmatpush1.msra.mxu0 0.0
    %903 = vmatprep.subr.mxu0 0.0
    %904 = vmatpush1.msra.mxu0 0.0
    %905 = vmatprep.subr.mxu0 0.0
    %906 = vmatpush1.msra.mxu0 0.0
    %907 = vmatprep.subr.mxu0 0.0
    %908 = vmatpush1.msra.mxu0 0.0
    %909 = vmatprep.subr.mxu0 0.0
    %910 = vmatpush1.msra.mxu0 0.0
    %911 = vmatprep.subr.mxu0 0.0
    %912 = vmatpush1.msra.mxu0 0.0
    %913 = vmatprep.subr.mxu0 0.0
    %914 = vmatpush1.msra.mxu0 0.0
    %915 = vmatprep.subr.mxu0 0.0
    %916 = vmatpush1.msra.mxu0 0.0
    %917 = vmatprep.subr.mxu0 0.0
    %918 = vmatpush1.msra.mxu0 0.0
    %919 = vmatprep.subr.mxu0 0.0
    %920 = vmatpush1.msra.mxu0 0.0
    %921 = vmatprep.subr.mxu0 0.0
    %922 = vmatpush1.msra.mxu0 0.0
    %923 = vmatprep.subr.mxu0 0.0
    %924 = vmatpush1.msra.mxu0 0.0
    %925 = vmatprep.subr.mxu0 0.0
    %926 = vmatpush1.msra.mxu0 0.0
    %927 = vmatprep.subr.mxu0 0.0
    %928 = vmatpush1.msra.mxu0 0.0
    %929 = vmatprep.subr.mxu0 0.0
    %930 = vmatpush1.msra.mxu0 0.0
    %931 = vmatprep.subr.mxu0 0.0
    %932 = vmatpush1.msra.mxu0 0.0
    %933 = vmatprep.subr.mxu0 0.0
    %934 = vmatpush1.msra.mxu0 0.0
    %935 = vmatprep.subr.mxu0 0.0
    %936 = vmatpush1.msra.mxu0 0.0
    %937 = vmatprep.subr.mxu0 0.0
    %938 = vmatpush1.msra.mxu0 0.0
    %939 = vmatprep.mubr.f32.mxu0 0.0
    %940 = vmatmul.mubr.f32.gmra.mrb[0].mxu0 %v866
    %v941 = vpop.f32.mrb[0].mxu0
    %v942 = vadd.f32 0.0, %v941
    %v943 = vpop.f32.mrb[0].mxu0
    %944 = vmatprep.mubr.f32.mxu0 0.0
    %945 = vmatmul.mubr.f32.gmra.mrb[0].mxu0 %v869
    %v946 = vpop.f32.mrb[0].mxu0
    %v947 = vadd.f32 0.0, %v946
    %v948 = vpop.f32.mrb[0].mxu0
    %949 = vdwg.mxu0
    %v950 = vadd.f32 %v854, %v942
    %v951 = vadd.f32 %v859, %v947
    %v952 = vmax.f32 %v950, 0.0
    %v953 = vmax.f32 %v951, 0.0
    %954 = vst [vmem:[#allocation17] sm:$0xff] %v952
    %955 = vst [vmem:[#allocation17 + $0x8] sm:$0xf] %v953
    %v956 = vld [vmem:[#allocation14] sm:$0x1f]
    %v957 = vld [vmem:[%s15] sm:$0x1f]
    %v959 = vsel %vm540, %v957, 0
    %v962 = vsel %vm462, %v439, 0
    %964 = vmatprep.subr.mxu0 0.0
    %965 = vmatpush1.msra.mxu0 %v434
    %966 = vmatprep.subr.mxu0 0.0
    %967 = vmatpush1.msra.mxu0 %v962
    %968 = vmatprep.subr.mxu0 0.0
    %969 = vmatpush1.msra.mxu0 0.0
    %970 = vmatprep.subr.mxu0 0.0
    %971 = vmatpush1.msra.mxu0 0.0
    %972 = vmatprep.subr.mxu0 0.0
    %973 = vmatpush1.msra.mxu0 0.0
    %974 = vmatprep.subr.mxu0 0.0
    %975 = vmatpush1.msra.mxu0 0.0
    %976 = vmatprep.subr.mxu0 0.0
    %977 = vmatpush1.msra.mxu0 0.0
    %978 = vmatprep.subr.mxu0 0.0
    %979 = vmatpush1.msra.mxu0 0.0
    %980 = vmatprep.subr.mxu0 0.0
    %981 = vmatpush1.msra.mxu0 0.0
    %982 = vmatprep.subr.mxu0 0.0
    %983 = vmatpush1.msra.mxu0 0.0
    %984 = vmatprep.subr.mxu0 0.0
    %985 = vmatpush1.msra.mxu0 0.0
    %986 = vmatprep.subr.mxu0 0.0
    %987 = vmatpush1.msra.mxu0 0.0
    %988 = vmatprep.subr.mxu0 0.0
    %989 = vmatpush1.msra.mxu0 0.0
    %990 = vmatprep.subr.mxu0 0.0
    %991 = vmatpush1.msra.mxu0 0.0
    %992 = vmatprep.subr.mxu0 0.0
    %993 = vmatpush1.msra.mxu0 0.0
    %994 = vmatprep.subr.mxu0 0.0
    %995 = vmatpush1.msra.mxu0 0.0
    %996 = vmatprep.subr.mxu0 0.0
    %997 = vmatpush1.msra.mxu0 0.0
    %998 = vmatprep.subr.mxu0 0.0
    %999 = vmatpush1.msra.mxu0 0.0
    %1000 = vmatprep.subr.mxu0 0.0
    %1001 = vmatpush1.msra.mxu0 0.0
    %1002 = vmatprep.subr.mxu0 0.0
    %1003 = vmatpush1.msra.mxu0 0.0
    %1004 = vmatprep.subr.mxu0 0.0
    %1005 = vmatpush1.msra.mxu0 0.0
    %1006 = vmatprep.subr.mxu0 0.0
    %1007 = vmatpush1.msra.mxu0 0.0
    %1008 = vmatprep.subr.mxu0 0.0
    %1009 = vmatpush1.msra.mxu0 0.0
    %1010 = vmatprep.subr.mxu0 0.0
    %1011 = vmatpush1.msra.mxu0 0.0
    %1012 = vmatprep.subr.mxu0 0.0
    %1013 = vmatpush1.msra.mxu0 0.0
    %1014 = vmatprep.subr.mxu0 0.0
    %1015 = vmatpush1.msra.mxu0 0.0
    %1016 = vmatprep.subr.mxu0 0.0
    %1017 = vmatpush1.msra.mxu0 0.0
    %1018 = vmatprep.subr.mxu0 0.0
    %1019 = vmatpush1.msra.mxu0 0.0
    %1020 = vmatprep.subr.mxu0 0.0
    %1021 = vmatpush1.msra.mxu0 0.0
    %1022 = vmatprep.subr.mxu0 0.0
    %1023 = vmatpush1.msra.mxu0 0.0
    %1024 = vmatprep.subr.mxu0 0.0
    %1025 = vmatpush1.msra.mxu0 0.0
    %1026 = vmatprep.subr.mxu0 0.0
    %1027 = vmatpush1.msra.mxu0 0.0
    %1028 = vmatprep.mubr.f32.mxu0 0.0
    %1029 = vmatmul.mubr.f32.gmra.mrb[0].mxu0 %v959
    %v1030 = vpop.f32.mrb[0].mxu0
    %v1031 = vadd.f32 0.0, %v1030
    %v1032 = vpop.f32.mrb[0].mxu0
    %1033 = vdwg.mxu0
    %v1035 = vsel %vm864, %v956, 0
    %v1038 = vsel %vm871, %v534, 0
    %1040 = vmatprep.subr.mxu0 0.0
    %1041 = vmatpush1.msra.mxu0 %v1038
    %1042 = vmatprep.subr.mxu0 0.0
    %1043 = vmatpush1.msra.mxu0 0.0
    %1044 = vmatprep.subr.mxu0 0.0
    %1045 = vmatpush1.msra.mxu0 0.0
    %1046 = vmatprep.subr.mxu0 0.0
    %1047 = vmatpush1.msra.mxu0 0.0
    %1048 = vmatprep.subr.mxu0 0.0
    %1049 = vmatpush1.msra.mxu0 0.0
    %1050 = vmatprep.subr.mxu0 0.0
    %1051 = vmatpush1.msra.mxu0 0.0
    %1052 = vmatprep.subr.mxu0 0.0
    %1053 = vmatpush1.msra.mxu0 0.0
    %1054 = vmatprep.subr.mxu0 0.0
    %1055 = vmatpush1.msra.mxu0 0.0
    %1056 = vmatprep.subr.mxu0 0.0
    %1057 = vmatpush1.msra.mxu0 0.0
    %1058 = vmatprep.subr.mxu0 0.0
    %1059 = vmatpush1.msra.mxu0 0.0
    %1060 = vmatprep.subr.mxu0 0.0
    %1061 = vmatpush1.msra.mxu0 0.0
    %1062 = vmatprep.subr.mxu0 0.0
    %1063 = vmatpush1.msra.mxu0 0.0
    %1064 = vmatprep.subr.mxu0 0.0
    %1065 = vmatpush1.msra.mxu0 0.0
    %1066 = vmatprep.subr.mxu0 0.0
    %1067 = vmatpush1.msra.mxu0 0.0
    %1068 = vmatprep.subr.mxu0 0.0
    %1069 = vmatpush1.msra.mxu0 0.0
    %1070 = vmatprep.subr.mxu0 0.0
    %1071 = vmatpush1.msra.mxu0 0.0
    %1072 = vmatprep.subr.mxu0 0.0
    %1073 = vmatpush1.msra.mxu0 0.0
    %1074 = vmatprep.subr.mxu0 0.0
    %1075 = vmatpush1.msra.mxu0 0.0
    %1076 = vmatprep.subr.mxu0 0.0
    %1077 = vmatpush1.msra.mxu0 0.0
    %1078 = vmatprep.subr.mxu0 0.0
    %1079 = vmatpush1.msra.mxu0 0.0
    %1080 = vmatprep.subr.mxu0 0.0
    %1081 = vmatpush1.msra.mxu0 0.0
    %1082 = vmatprep.subr.mxu0 0.0
    %1083 = vmatpush1.msra.mxu0 0.0
    %1084 = vmatprep.subr.mxu0 0.0
    %1085 = vmatpush1.msra.mxu0 0.0
    %1086 = vmatprep.subr.mxu0 0.0
    %1087 = vmatpush1.msra.mxu0 0.0
    %1088 = vmatprep.subr.mxu0 0.0
    %1089 = vmatpush1.msra.mxu0 0.0
    %1090 = vmatprep.subr.mxu0 0.0
    %1091 = vmatpush1.msra.mxu0 0.0
    %1092 = vmatprep.subr.mxu0 0.0
    %1093 = vmatpush1.msra.mxu0 0.0
    %1094 = vmatprep.subr.mxu0 0.0
    %1095 = vmatpush1.msra.mxu0 0.0
    %1096 = vmatprep.subr.mxu0 0.0
    %1097 = vmatpush1.msra.mxu0 0.0
    %1098 = vmatprep.subr.mxu0 0.0
    %1099 = vmatpush1.msra.mxu0 0.0
    %1100 = vmatprep.subr.mxu0 0.0
    %1101 = vmatpush1.msra.mxu0 0.0
    %1102 = vmatprep.subr.mxu0 0.0
    %1103 = vmatpush1.msra.mxu0 0.0
    %1104 = vmatprep.mubr.f32.mxu0 0.0
    %1105 = vmatmul.mubr.f32.gmra.mrb[0].mxu0 %v1035
    %v1106 = vpop.f32.mrb[0].mxu0
    %v1107 = vadd.f32 %v1031, %v1106
    %v1108 = vpop.f32.mrb[0].mxu0
    %1109 = vdwg.mxu0
    %v1110 = vmax.f32 %v1107, 0.0
    %1111 = vst [vmem:[#allocation19] sm:$0x1f] %v1110
    // Predicated region
    $region98: #{scconv_layer_forward.1} parent=1 // pred_check
      _
    $region99: #{scconv_layer_forward.1} parent=1 // pred_check_branch
      %1113 = sbr.rel (0) target = $region101
    $region100: #{scconv_layer_forward.1} parent=1 // pred_region
      %s1115 = ssub.s32 128, 128
      %1116 = vsyncadd [#allocation4], %s1115
      %s1118 = sshll.u32 [#allocation16], 4
      %s1119 = int_to_ptr.vmem [resolvable:$true] %s1118
      %1121 = dma.vmem_to_hbm [thread:$0]  %s1119, 128, %s16, [#allocation4]
    $region101: #{scconv_layer_forward.1} parent=1 // pred_fallthru
      _
    // Predicated region
    $region102: #{scconv_layer_forward.1} parent=1 // pred_check
      _
    $region103: #{scconv_layer_forward.1} parent=1 // pred_check_branch
      %1123 = sbr.rel (0) target = $region105
    $region104: #{scconv_layer_forward.1} parent=1 // pred_region
      %s1125 = ssub.s32 256, 256
      %1126 = vsyncadd [#allocation18], %s1125
      %s1127 = sshll.u32 [#allocation17], 4
      %s1128 = int_to_ptr.vmem [resolvable:$true] %s1127
      %1133 = dma.vmem_to_hbm [thread:$0]  %s1128, 256, %s17, [#allocation18], 128, 128, 8
    $region105: #{scconv_layer_forward.1} parent=1 // pred_fallthru
      _
    // Predicated region
    $region106: #{scconv_layer_forward.1} parent=1 // pred_check
      _
    $region107: #{scconv_layer_forward.1} parent=1 // pred_check_branch
      %1135 = sbr.rel (0) target = $region109
    $region108: #{scconv_layer_forward.1} parent=1 // pred_region
      %s1137 = ssub.s32 128, 128
      %1138 = vsyncadd [#allocation18], %s1137
      %s1140 = sshll.u32 [#allocation19], 4
      %s1141 = int_to_ptr.vmem [resolvable:$true] %s1140
      %1143 = dma.vmem_to_hbm [thread:$0]  %s1141, 128, %s18, [#allocation18]
    $region109: #{scconv_layer_forward.1} parent=1 // pred_fallthru
      _
    // Predicated region
    $region110: #{scconv_layer_forward.1} parent=1 // pred_check
      _
    $region111: #{scconv_layer_forward.1} parent=1 // pred_check_branch
      %1145 = sbr.rel (0) target = $region113
    $region112: #{scconv_layer_forward.1} parent=1 // pred_region
      %1146 = dma.done [#allocation4], 128
    $region113: #{scconv_layer_forward.1} parent=1 // pred_fallthru
      _
    // Predicated region
    $region114: #{scconv_layer_forward.1} parent=1 // pred_check
      _
    $region115: #{scconv_layer_forward.1} parent=1 // pred_check_branch
      %1148 = sbr.rel (0) target = $region117
    $region116: #{scconv_layer_forward.1} parent=1 // pred_region
      %1149 = dma.done [#allocation18], 256
    $region117: #{scconv_layer_forward.1} parent=1 // pred_fallthru
      _
    // Predicated region
    $region118: #{scconv_layer_forward.1} parent=1 // pred_check
      _
    $region119: #{scconv_layer_forward.1} parent=1 // pred_check_branch
      %1151 = sbr.rel (0) target = $region121
    $region120: #{scconv_layer_forward.1} parent=1 // pred_region
      %1152 = dma.done [#allocation18], 128
    $region121: #{scconv_layer_forward.1} parent=1 // pred_fallthru
      _
    %1153 = vsyncpa [#allocation3], 1
    %1154 = vsyncpa [#allocation6], 1
    %1155 = vsyncpa [#allocation9], 1
    %1156 = vsyncpa [#allocation12], 1
    %1157 = vsyncpa [#allocation15], 1
    %1158 = vsyncpa [#allocation4], 1
    %1159 = vsyncpa [#allocation18], 1

</llo_original>
